<compile_context>
chip_gen: v7x
topology: tpu7x:2x2x1
jax: 0.10.0
libtpu: 0.0.40
codegen_flags: <defaults>
</compile_context>

<pallas_src>
import functools

import jax
import jax.numpy as jnp
from jax.experimental import pallas as pl
from jax.experimental.pallas import tpu as pltpu


def _round_up(v, m):
    return ((v + m - 1) // m) * m


def _pad2(x, rows, cols):
    r, c = x.shape
    if rows == r and cols == c:
        return x
    return jnp.pad(x, ((0, rows - r), (0, cols - c)))


def _pick_tile(n_p, candidates):
    for t in candidates:
        if n_p % t == 0:
            return t
    return 128


def _device_budget():
    """(vmem_limit_bytes, fuse_max_rows) tuned per TPU generation."""
    try:
        kind = jax.devices()[0].device_kind.lower()
    except Exception:
        kind = ""
    if ("v5" in kind) or ("v6" in kind):
        # 128 MiB physical VMEM: large limit keeps big tiles / fused path viable.
        return 96 * 1024 * 1024, 4096
    # v7x has only 64 MiB physical VMEM; unknown parts get the safe budget too.
    return 48 * 1024 * 1024, 2048


# --------------------------------------------------------------------------
# Path 1: fully fused kernel (small graphs; A DMA'd once, reused by 3 layers).
# --------------------------------------------------------------------------
def _gcn_fused_kernel(a_ref, x_ref, w1_ref, w2_ref, w3_ref, o_ref):
    a = a_ref[...]                                              # bf16 [Np, Np]

    # layer 1: relu( A @ (x @ W1) )   (reassociated)
    z1 = jnp.dot(x_ref[...], w1_ref[...], preferred_element_type=jnp.float32)
    h1 = jnp.maximum(
        jnp.dot(a, z1.astype(jnp.bfloat16), preferred_element_type=jnp.float32),
        0.0,
    ).astype(jnp.bfloat16)

    # layer 2: relu( A @ (h1 @ W2) )
    z2 = jnp.dot(h1, w2_ref[...], preferred_element_type=jnp.float32)
    h2 = jnp.maximum(
        jnp.dot(a, z2.astype(jnp.bfloat16), preferred_element_type=jnp.float32),
        0.0,
    ).astype(jnp.bfloat16)

    # output layer: A @ (h2 @ W3)
    z3 = jnp.dot(h2, w3_ref[...], preferred_element_type=jnp.float32)
    o_ref[...] = jnp.dot(
        a, z3.astype(jnp.bfloat16), preferred_element_type=jnp.float32
    ).astype(o_ref.dtype)


def _gcn_fused(a_p, x_p, w1_p, w2_p, w3_p, vmem_limit):
    n_p = a_p.shape[0]
    c_p = w3_p.shape[1]
    full = lambda shape: pl.BlockSpec(shape, lambda: (0, 0))
    return pl.pallas_call(
        _gcn_fused_kernel,
        out_shape=jax.ShapeDtypeStruct((n_p, c_p), jnp.float32),
        grid=(),
        in_specs=[
            full(a_p.shape),
            full(x_p.shape),
            full(w1_p.shape),
            full(w2_p.shape),
            full(w3_p.shape),
        ],
        out_specs=full((n_p, c_p)),
        compiler_params=pltpu.CompilerParams(vmem_limit_bytes=vmem_limit),
    )(a_p, x_p, w1_p, w2_p, w3_p)


# --------------------------------------------------------------------------
# Path 2 building block A: feature projection  Z = H @ W  (computed ONCE
# per layer, row-tiled over nodes; W is small and VMEM-resident).
# --------------------------------------------------------------------------
def _project_kernel(h_ref, w_ref, o_ref):
    o_ref[...] = jnp.dot(
        h_ref[...], w_ref[...], preferred_element_type=jnp.float32
    ).astype(o_ref.dtype)


def _project(h, w, row_tile, vmem_limit):
    n_p, f_in = h.shape
    f_out = w.shape[1]
    return pl.pallas_call(
        _project_kernel,
        out_shape=jax.ShapeDtypeStruct((n_p, f_out), jnp.bfloat16),
        grid=(n_p // row_tile,),
        in_specs=[
            pl.BlockSpec((row_tile, f_in), lambda i: (i, 0)),
            pl.BlockSpec((f_in, f_out), lambda i: (0, 0)),
        ],
        out_specs=pl.BlockSpec((row_tile, f_out), lambda i: (i, 0)),
        compiler_params=pltpu.CompilerParams(
            dimension_semantics=("parallel",),
            vmem_limit_bytes=vmem_limit,
        ),
    )(h, w)


# --------------------------------------------------------------------------
# Path 2 building block B: O = maybe_relu(A @ Z), K-tiled accumulation so
# VMEM use is independent of N (A block: (row_tile, k_tile) only).
# --------------------------------------------------------------------------
def _a_matmul_kernel(a_ref, z_ref, o_ref, acc_ref, *, apply_relu):
    @pl.when(pl.program_id(1) == 0)
    def _():
        acc_ref[...] = jnp.zeros_like(acc_ref)

    acc_ref[...] += jnp.dot(
        a_ref[...], z_ref[...], preferred_element_type=jnp.float32
    )

    @pl.when(pl.program_id(1) == pl.num_programs(1) - 1)
    def _():
        acc = acc_ref[...]
        if apply_relu:
            acc = jnp.maximum(acc, 0.0)
        o_ref[...] = acc.astype(o_ref.dtype)


def _a_matmul(a_p, z, out_dtype, apply_relu, row_tile, k_tile, vmem_limit):
    n_p = a_p.shape[0]
    f_out = z.shape[1]
    return pl.pallas_call(
        functools.partial(_a_matmul_kernel, apply_relu=apply_relu),
        out_shape=jax.ShapeDtypeStruct((n_p, f_out), out_dtype),
        grid=(n_p // row_tile, n_p // k_tile),
        in_specs=[
            pl.BlockSpec((row_tile, k_tile), lambda i, k: (i, k)),  # A tile
            pl.BlockSpec((k_tile, f_out), lambda i, k: (k, 0)),     # Z K-slab
        ],
        out_specs=pl.BlockSpec((row_tile, f_out), lambda i, k: (i, 0)),
        scratch_shapes=[pltpu.VMEM((row_tile, f_out), jnp.float32)],
        compiler_params=pltpu.CompilerParams(
            dimension_semantics=("parallel", "arbitrary"),
            vmem_limit_bytes=vmem_limit,
        ),
    )(a_p, z)


# --------------------------------------------------------------------------
# Public wrapper
# --------------------------------------------------------------------------
def gcn_forward(a_hat, x, w1, w2, w3, *, row_tile=None, k_tile=None,
                fuse_max_rows=None):
    """a_hat: [N, N]; x: [N, D]; w1/w2/w3 are torch-style [out, in] weights."""
    n, d = x.shape
    d1 = w1.shape[0]          # D // 2
    d2 = w2.shape[0]          # D // 4
    c = w3.shape[0]           # output classes

    vmem_limit, auto_fuse_max = _device_budget()
    if fuse_max_rows is None:
        fuse_max_rows = auto_fuse_max

    # lane-dense padded dims (multiples of 128); N padded ONLY to 128
    d_p = _round_up(d, 128)
    d1_p = _round_up(d1, 128)
    d2_p = _round_up(d2, 128)
    c_p = _round_up(c, 128)
    n_p = _round_up(n, 128)

    bf16 = jnp.bfloat16
    # cast to bf16 BEFORE padding (halves the padded-copy HBM traffic)
    a_p = _pad2(a_hat.astype(bf16), n_p, n_p)
    x_p = _pad2(x.astype(bf16), n_p, d_p)
    # torch Linear computes x @ W.T -> pre-transpose to [in, out]
    w1_p = _pad2(w1.T.astype(bf16), d_p, d1_p)
    w2_p = _pad2(w2.T.astype(bf16), d1_p, d2_p)
    w3_p = _pad2(w3.T.astype(bf16), d2_p, c_p)

    if n <= fuse_max_rows:
        out = _gcn_fused(a_p, x_p, w1_p, w2_p, w3_p, vmem_limit)
    else:
        rt = row_tile if row_tile is not None else _pick_tile(n_p, (512, 256, 128))
        kt = k_tile if k_tile is not None else _pick_tile(
            n_p, (2048, 1024, 512, 256, 128))
        # layer 1
        z1 = _project(x_p, w1_p, rt, vmem_limit)
        h1 = _a_matmul(a_p, z1, bf16, True, rt, kt, vmem_limit)
        # layer 2
        z2 = _project(h1, w2_p, rt, vmem_limit)
        h2 = _a_matmul(a_p, z2, bf16, True, rt, kt, vmem_limit)
        # output layer
        z3 = _project(h2, w3_p, rt, vmem_limit)
        out = _a_matmul(a_p, z3, jnp.float32, False, rt, kt, vmem_limit)

    return out[:n, :c]


def build_a_hat(key, n):
    """A_hat = D_tilde @ A_tilde @ D_tilde with A_tilde = A + I (synthetic)."""
    adj = (jax.random.uniform(key, (n, n)) > 0.5).astype(jnp.float32)
    adj = jnp.maximum(adj, adj.T)                        # symmetric adjacency
    a_tilde = adj * (1.0 - jnp.eye(n)) + jnp.eye(n)      # add self loops
    deg = jnp.sum(a_tilde, axis=1)
    d_tilde = jnp.diag(1.0 / jnp.sqrt(deg))
    return d_tilde @ a_tilde @ d_tilde


def _reference(a_hat, x, w1, w2, w3):
    relu = lambda t: jnp.maximum(t, 0.0)
    h1 = relu((a_hat @ x) @ w1.T)
    h2 = relu((a_hat @ h1) @ w2.T)
    return (a_hat @ h2) @ w3.T


if __name__ == "__main__":
    key = jax.random.PRNGKey(0)
    k_a, k_x, k_w1, k_w2, k_w3, k_a2, k_x2 = jax.random.split(key, 7)

    N = 8            # number of graph nodes
    INPUT_DIM = 32   # node feature dim
    OUT_CLASS = 4    # output classes

    a_hat = build_a_hat(k_a, N)
    x = jax.random.normal(k_x, (N, INPUT_DIM), dtype=jnp.float32)

    # nn.Linear(in, out, bias=False) weights have shape [out, in]
    w1 = jax.random.normal(k_w1, (INPUT_DIM // 2, INPUT_DIM), jnp.float32) * 0.1
    w2 = jax.random.normal(k_w2, (INPUT_DIM // 4, INPUT_DIM // 2), jnp.float32) * 0.1
    w3 = jax.random.normal(k_w3, (OUT_CLASS, INPUT_DIM // 4), jnp.float32) * 0.1

    # --- small graph: fused single-kernel path --------------------------------
    out = gcn_forward(a_hat, x, w1, w2, w3)
    jax.block_until_ready(out)
    ref = _reference(a_hat, x, w1, w2, w3)
    # bf16 operands (f32 accumulation) => loosened tolerance vs f32 reference
    assert out.shape == (N, OUT_CLASS)
    assert jnp.allclose(out, ref, atol=2e-2, rtol=2e-2), "fused path mismatch"

    # --- larger graph: row- and K-tiled per-layer path (exercises both grids) -
    N2 = 640
    a_hat2 = build_a_hat(k_a2, N2)
    x2 = jax.random.normal(k_x2, (N2, INPUT_DIM), dtype=jnp.float32)
    out2 = gcn_forward(a_hat2, x2, w1, w2, w3,
                       row_tile=128, k_tile=128, fuse_max_rows=0)
    jax.block_until_ready(out2)
    ref2 = _reference(a_hat2, x2, w1, w2, w3)
    assert out2.shape == (N2, OUT_CLASS)
    assert jnp.allclose(out2, ref2, atol=2e-2, rtol=2e-2), "tiled path mismatch"

    print("KERNEL_OK")
</pallas_src>

<mosaic_0001>
module attributes {stable_mosaic.version = 11 : i64} {
  func.func @_gcn_fused_kernel(%arg0: memref<128x128xbf16, #tpu.memory_space<vmem>>, %arg1: memref<128x128xbf16, #tpu.memory_space<vmem>>, %arg2: memref<128x128xbf16, #tpu.memory_space<vmem>>, %arg3: memref<128x128xbf16, #tpu.memory_space<vmem>>, %arg4: memref<128x128xbf16, #tpu.memory_space<vmem>>, %arg5: memref<128x128xf32, #tpu.memory_space<vmem>>) attributes {dimension_semantics = [], scalar_prefetch = 0 : i64, scratch_operands = 0 : i64, tpu.core_type = #tpu.core_type<tc>} {
    %c0 = arith.constant 0 : index
    %c0_0 = arith.constant 0 : index
    %0 = vector.load %arg0[%c0, %c0_0] : memref<128x128xbf16, #tpu.memory_space<vmem>>, vector<128x128xbf16>
    %c0_1 = arith.constant 0 : index
    %c0_2 = arith.constant 0 : index
    %1 = vector.load %arg1[%c0_1, %c0_2] : memref<128x128xbf16, #tpu.memory_space<vmem>>, vector<128x128xbf16>
    %c0_3 = arith.constant 0 : index
    %c0_4 = arith.constant 0 : index
    %2 = vector.load %arg2[%c0_3, %c0_4] : memref<128x128xbf16, #tpu.memory_space<vmem>>, vector<128x128xbf16>
    %cst = arith.constant dense<0.000000e+00> : vector<128x128xf32>
    %3 = tpu.matmul %1, %2, %cst {dimension_numbers = #tpu.dot_dimension_numbers<[1], [0], [0], [1], [0, 0, 1, 1], [], []>} : vector<128x128xbf16>, vector<128x128xbf16>, vector<128x128xf32> -> vector<128x128xf32>
    %4 = arith.truncf %3 : vector<128x128xf32> to vector<128x128xbf16>
    %cst_5 = arith.constant dense<0.000000e+00> : vector<128x128xf32>
    %5 = tpu.matmul %0, %4, %cst_5 {dimension_numbers = #tpu.dot_dimension_numbers<[1], [0], [0], [1], [0, 0, 1, 1], [], []>} : vector<128x128xbf16>, vector<128x128xbf16>, vector<128x128xf32> -> vector<128x128xf32>
    %cst_6 = arith.constant 0.000000e+00 : f32
    %6 = vector.broadcast %cst_6 : f32 to vector<128x128xf32>
    %7 = arith.maximumf %5, %6 : vector<128x128xf32>
    %8 = arith.truncf %7 : vector<128x128xf32> to vector<128x128xbf16>
    %c0_7 = arith.constant 0 : index
    %c0_8 = arith.constant 0 : index
    %9 = vector.load %arg3[%c0_7, %c0_8] : memref<128x128xbf16, #tpu.memory_space<vmem>>, vector<128x128xbf16>
    %cst_9 = arith.constant dense<0.000000e+00> : vector<128x128xf32>
    %10 = tpu.matmul %8, %9, %cst_9 {dimension_numbers = #tpu.dot_dimension_numbers<[1], [0], [0], [1], [0, 0, 1, 1], [], []>} : vector<128x128xbf16>, vector<128x128xbf16>, vector<128x128xf32> -> vector<128x128xf32>
    %11 = arith.truncf %10 : vector<128x128xf32> to vector<128x128xbf16>
    %cst_10 = arith.constant dense<0.000000e+00> : vector<128x128xf32>
    %12 = tpu.matmul %0, %11, %cst_10 {dimension_numbers = #tpu.dot_dimension_numbers<[1], [0], [0], [1], [0, 0, 1, 1], [], []>} : vector<128x128xbf16>, vector<128x128xbf16>, vector<128x128xf32> -> vector<128x128xf32>
    %cst_11 = arith.constant 0.000000e+00 : f32
    %13 = vector.broadcast %cst_11 : f32 to vector<128x128xf32>
    %14 = arith.maximumf %12, %13 : vector<128x128xf32>
    %15 = arith.truncf %14 : vector<128x128xf32> to vector<128x128xbf16>
    %c0_12 = arith.constant 0 : index
    %c0_13 = arith.constant 0 : index
    %16 = vector.load %arg4[%c0_12, %c0_13] : memref<128x128xbf16, #tpu.memory_space<vmem>>, vector<128x128xbf16>
    %cst_14 = arith.constant dense<0.000000e+00> : vector<128x128xf32>
    %17 = tpu.matmul %15, %16, %cst_14 {dimension_numbers = #tpu.dot_dimension_numbers<[1], [0], [0], [1], [0, 0, 1, 1], [], []>} : vector<128x128xbf16>, vector<128x128xbf16>, vector<128x128xf32> -> vector<128x128xf32>
    %18 = arith.truncf %17 : vector<128x128xf32> to vector<128x128xbf16>
    %cst_15 = arith.constant dense<0.000000e+00> : vector<128x128xf32>
    %19 = tpu.matmul %0, %18, %cst_15 {dimension_numbers = #tpu.dot_dimension_numbers<[1], [0], [0], [1], [0, 0, 1, 1], [], []>} : vector<128x128xbf16>, vector<128x128xbf16>, vector<128x128xf32> -> vector<128x128xf32>
    %c0_16 = arith.constant 0 : index
    %c0_17 = arith.constant 0 : index
    %20 = vector.load %arg5[%c0_16, %c0_17] : memref<128x128xf32, #tpu.memory_space<vmem>>, vector<128x128xf32>
    tpu.vector_store %arg5[%c0_16, %c0_17], %19 {strides = array<i32>} : memref<128x128xf32, #tpu.memory_space<vmem>>, vector<128x128xf32>,
    return
  }
}

</mosaic_0001>

<llo_original>
// kernel: tpu_custom_call.1
$region0: #{tpu_custom_call.1}
  #allocation0 [shape = 'u32[]', space=smem, size = 0x4, offset = 0x4, fixed_abs, tag = 'smem constant byte address 0x4 - core index']
  #allocation1 [shape = 'u32[144,128]{1,0:T(1,128)}', space=vmem, size = 0x12000, scoped, tag = 'internal scratch']
  %s0 = inlined_call_operand.hbm [shape: bf16[128,128], index: 0, kind: input, shape index: {}]
  %s1 = inlined_call_operand.hbm [shape: bf16[128,128], index: 1, kind: input, shape index: {}]
  %s2 = inlined_call_operand.hbm [shape: bf16[128,128], index: 2, kind: input, shape index: {}]
  %s3 = inlined_call_operand.hbm [shape: bf16[128,128], index: 3, kind: input, shape index: {}]
  %s4 = inlined_call_operand.hbm [shape: bf16[128,128], index: 4, kind: input, shape index: {}]
  %s5 = inlined_call_operand.hbm [shape: f32[128,128], index: 5, kind: output, shape index: {}]
  %s6 = sld [smem:[#allocation0]]
  $region50: #{tpu_custom_call.1} parent=0
    _
  %s8 = ssub.s32 1, %s6
  %s9 = scalar_select 0, %s8, %s6
  $region1: #{tpu_custom_call.1} parent=0
    #allocation2 [shape = 'u8[32768]{0}', space=vmem, size = 0x8000, scoped, tag = 'input window, operand 0, single buffered']
    #allocation3 [shape = 's32[1]{0}', space=sflag, size = 0x4, scoped, tag = 'scoped memory for tpu_custom_call.1']
    #allocation4 [shape = 's32[1]{0}', space=sflag, size = 0x4, scoped, tag = 'scoped memory for tpu_custom_call.1']
    #allocation5 [shape = 'u8[32768]{0}', space=vmem, size = 0x8000, scoped, tag = 'input window, operand 1, single buffered']
    #allocation6 [shape = 's32[1]{0}', space=sflag, size = 0x4, scoped, tag = 'scoped memory for tpu_custom_call.1']
    #allocation7 [shape = 'u8[32768]{0}', space=vmem, size = 0x8000, scoped, tag = 'input window, operand 2, single buffered']
    #allocation8 [shape = 'u8[32768]{0}', space=vmem, size = 0x8000, scoped, tag = 'input window, operand 3, single buffered']
    #allocation9 [shape = 's32[1]{0}', space=sflag, size = 0x4, scoped, tag = 'scoped memory for tpu_custom_call.1']
    #allocation10 [shape = 'u8[32768]{0}', space=vmem, size = 0x8000, scoped, tag = 'input window, operand 4, single buffered']
    #allocation11 [shape = 'u8[65536]{0}', space=vmem, size = 0x10000, scoped, tag = 'output window, operand 0, single buffered']
    %10 = vsyncpa [#allocation3], 0
    %11 = vsyncpa [#allocation6], 0
    %12 = vsyncpa [#allocation9], 0
    %13 = vsyncpa [#allocation4], 0
    // Predicated region
    $region2: #{tpu_custom_call.1} parent=1 // pred_check
      _
    $region3: #{tpu_custom_call.1} parent=1 // pred_check_branch
      %15 = sbr.rel (0) target = $region5
    $region4: #{tpu_custom_call.1} parent=1 // pred_region
      %s17 = ssub.s32 1024, 1024
      %18 = vsyncadd [#allocation3], %s17
      %s19 = sshll.u32 [#allocation2], 4
      %s20 = int_to_ptr.vmem [resolvable:$true] %s19
      %25 = dma.hbm_to_vmem [thread:$0]  %s0, 1024, %s20, [#allocation3], 64, 64, 4
    $region5: #{tpu_custom_call.1} parent=1 // pred_fallthru
      _
    // Predicated region
    $region6: #{tpu_custom_call.1} parent=1 // pred_check
      _
    $region7: #{tpu_custom_call.1} parent=1 // pred_check_branch
      %27 = sbr.rel (0) target = $region9
    $region8: #{tpu_custom_call.1} parent=1 // pred_region
      %s29 = ssub.s32 1024, 1024
      %30 = vsyncadd [#allocation6], %s29
      %s31 = sshll.u32 [#allocation5], 4
      %s32 = int_to_ptr.vmem [resolvable:$true] %s31
      %37 = dma.hbm_to_vmem [thread:$0]  %s1, 1024, %s32, [#allocation6], 64, 64, 4
    $region9: #{tpu_custom_call.1} parent=1 // pred_fallthru
      _
    // Predicated region
    $region10: #{tpu_custom_call.1} parent=1 // pred_check
      _
    $region11: #{tpu_custom_call.1} parent=1 // pred_check_branch
      %39 = sbr.rel (0) target = $region13
    $region12: #{tpu_custom_call.1} parent=1 // pred_region
      %s41 = ssub.s32 1024, 1024
      %42 = vsyncadd [#allocation6], %s41
      %s43 = sshll.u32 [#allocation7], 4
      %s44 = int_to_ptr.vmem [resolvable:$true] %s43
      %49 = dma.hbm_to_vmem [thread:$0]  %s2, 1024, %s44, [#allocation6], 64, 64, 4
    $region13: #{tpu_custom_call.1} parent=1 // pred_fallthru
      _
    // Predicated region
    $region14: #{tpu_custom_call.1} parent=1 // pred_check
      _
    $region15: #{tpu_custom_call.1} parent=1 // pred_check_branch
      %51 = sbr.rel (0) target = $region17
    $region16: #{tpu_custom_call.1} parent=1 // pred_region
      %s53 = ssub.s32 1024, 1024
      %54 = vsyncadd [#allocation9], %s53
      %s55 = sshll.u32 [#allocation8], 4
      %s56 = int_to_ptr.vmem [resolvable:$true] %s55
      %61 = dma.hbm_to_vmem [thread:$0]  %s3, 1024, %s56, [#allocation9], 64, 64, 4
    $region17: #{tpu_custom_call.1} parent=1 // pred_fallthru
      _
    // Predicated region
    $region18: #{tpu_custom_call.1} parent=1 // pred_check
      _
    $region19: #{tpu_custom_call.1} parent=1 // pred_check_branch
      %63 = sbr.rel (0) target = $region21
    $region20: #{tpu_custom_call.1} parent=1 // pred_region
      %s65 = ssub.s32 1024, 1024
      %66 = vsyncadd [#allocation9], %s65
      %s67 = sshll.u32 [#allocation10], 4
      %s68 = int_to_ptr.vmem [resolvable:$true] %s67
      %73 = dma.hbm_to_vmem [thread:$0]  %s4, 1024, %s68, [#allocation9], 64, 64, 4
    $region21: #{tpu_custom_call.1} parent=1 // pred_fallthru
      _
    // Predicated region
    $region22: #{tpu_custom_call.1} parent=1 // pred_check
      _
    $region23: #{tpu_custom_call.1} parent=1 // pred_check_branch
      %75 = sbr.rel (0) target = $region25
    $region24: #{tpu_custom_call.1} parent=1 // pred_region
      %76 = dma.done [#allocation3], 1024
    $region25: #{tpu_custom_call.1} parent=1 // pred_fallthru
      _
    // Predicated region
    $region26: #{tpu_custom_call.1} parent=1 // pred_check
      _
    $region27: #{tpu_custom_call.1} parent=1 // pred_check_branch
      %78 = sbr.rel (0) target = $region29
    $region28: #{tpu_custom_call.1} parent=1 // pred_region
      %79 = dma.done [#allocation6], 1024
    $region29: #{tpu_custom_call.1} parent=1 // pred_fallthru
      _
    // Predicated region
    $region30: #{tpu_custom_call.1} parent=1 // pred_check
      _
    $region31: #{tpu_custom_call.1} parent=1 // pred_check_branch
      %81 = sbr.rel (0) target = $region33
    $region32: #{tpu_custom_call.1} parent=1 // pred_region
      %82 = dma.done [#allocation6], 1024
    $region33: #{tpu_custom_call.1} parent=1 // pred_fallthru
      _
    // Predicated region
    $region34: #{tpu_custom_call.1} parent=1 // pred_check
      _
    $region35: #{tpu_custom_call.1} parent=1 // pred_check_branch
      %84 = sbr.rel (0) target = $region37
    $region36: #{tpu_custom_call.1} parent=1 // pred_region
      %85 = dma.done [#allocation9], 1024
    $region37: #{tpu_custom_call.1} parent=1 // pred_fallthru
      _
    // Predicated region
    $region38: #{tpu_custom_call.1} parent=1 // pred_check
      _
    $region39: #{tpu_custom_call.1} parent=1 // pred_check_branch
      %87 = sbr.rel (0) target = $region41
    $region40: #{tpu_custom_call.1} parent=1 // pred_region
      %88 = dma.done [#allocation9], 1024
    $region41: #{tpu_custom_call.1} parent=1 // pred_fallthru
      _
    %v90 = vld [vmem:[#allocation2] sm:$0xf]
    %v91 = vld [vmem:[#allocation2 + $0x4] sm:$0xf]
    %v92 = vld [vmem:[#allocation2 + $0x8] sm:$0xf]
    %v93 = vld [vmem:[#allocation2 + $0xc] sm:$0xf]
    %v94 = vld [vmem:[#allocation2 + $0x10] sm:$0xf]
    %v95 = vld [vmem:[#allocation2 + $0x14] sm:$0xf]
    %v96 = vld [vmem:[#allocation2 + $0x18] sm:$0xf]
    %v97 = vld [vmem:[#allocation2 + $0x1c] sm:$0xf]
    %v98 = vld [vmem:[#allocation2 + $0x20] sm:$0xf]
    %v99 = vld [vmem:[#allocation2 + $0x24] sm:$0xf]
    %v100 = vld [vmem:[#allocation2 + $0x28] sm:$0xf]
    %v101 = vld [vmem:[#allocation2 + $0x2c] sm:$0xf]
    %v102 = vld [vmem:[#allocation2 + $0x30] sm:$0xf]
    %v103 = vld [vmem:[#allocation2 + $0x34] sm:$0xf]
    %v104 = vld [vmem:[#allocation2 + $0x38] sm:$0xf]
    %v105 = vld [vmem:[#allocation2 + $0x3c] sm:$0xf]
    %v106 = vld [vmem:[#allocation5] sm:$0xf]
    %v107 = vld [vmem:[#allocation5 + $0x4] sm:$0xf]
    %v108 = vld [vmem:[#allocation5 + $0x8] sm:$0xf]
    %v109 = vld [vmem:[#allocation5 + $0xc] sm:$0xf]
    %v110 = vld [vmem:[#allocation5 + $0x10] sm:$0xf]
    %v111 = vld [vmem:[#allocation5 + $0x14] sm:$0xf]
    %v112 = vld [vmem:[#allocation5 + $0x18] sm:$0xf]
    %v113 = vld [vmem:[#allocation5 + $0x1c] sm:$0xf]
    %v114 = vld [vmem:[#allocation5 + $0x20] sm:$0xf]
    %v115 = vld [vmem:[#allocation5 + $0x24] sm:$0xf]
    %v116 = vld [vmem:[#allocation5 + $0x28] sm:$0xf]
    %v117 = vld [vmem:[#allocation5 + $0x2c] sm:$0xf]
    %v118 = vld [vmem:[#allocation5 + $0x30] sm:$0xf]
    %v119 = vld [vmem:[#allocation5 + $0x34] sm:$0xf]
    %v120 = vld [vmem:[#allocation5 + $0x38] sm:$0xf]
    %v121 = vld [vmem:[#allocation5 + $0x3c] sm:$0xf]
    %v122 = vld [vmem:[#allocation7] sm:$0xf]
    %v123 = vld [vmem:[#allocation7 + $0x4] sm:$0xf]
    %v124 = vld [vmem:[#allocation7 + $0x8] sm:$0xf]
    %v125 = vld [vmem:[#allocation7 + $0xc] sm:$0xf]
    %v126 = vld [vmem:[#allocation7 + $0x10] sm:$0xf]
    %v127 = vld [vmem:[#allocation7 + $0x14] sm:$0xf]
    %v128 = vld [vmem:[#allocation7 + $0x18] sm:$0xf]
    %v129 = vld [vmem:[#allocation7 + $0x1c] sm:$0xf]
    %v130 = vld [vmem:[#allocation7 + $0x20] sm:$0xf]
    %v131 = vld [vmem:[#allocation7 + $0x24] sm:$0xf]
    %v132 = vld [vmem:[#allocation7 + $0x28] sm:$0xf]
    %v133 = vld [vmem:[#allocation7 + $0x2c] sm:$0xf]
    %v134 = vld [vmem:[#allocation7 + $0x30] sm:$0xf]
    %v135 = vld [vmem:[#allocation7 + $0x34] sm:$0xf]
    %v136 = vld [vmem:[#allocation7 + $0x38] sm:$0xf]
    %v137 = vld [vmem:[#allocation7 + $0x3c] sm:$0xf]
    %v154 = vunpack.c.l.b16 %v106
    %v155 = vunpack.c.l.b16 %v107
    %v156 = vunpack.c.l.b16 %v108
    %v157 = vunpack.c.l.b16 %v109
    %v158 = vunpack.c.l.b16 %v110
    %v159 = vunpack.c.l.b16 %v111
    %v160 = vunpack.c.l.b16 %v112
    %v161 = vunpack.c.l.b16 %v113
    %v162 = vunpack.c.l.b16 %v114
    %v163 = vunpack.c.l.b16 %v115
    %v164 = vunpack.c.l.b16 %v116
    %v165 = vunpack.c.l.b16 %v117
    %v166 = vunpack.c.l.b16 %v118
    %v167 = vunpack.c.l.b16 %v119
    %v168 = vunpack.c.l.b16 %v120
    %v169 = vunpack.c.l.b16 %v121
    %v170 = vpack.c.b16 %v155, %v154
    %v171 = vpack.c.b16 %v157, %v156
    %v172 = vpack.c.b16 %v159, %v158
    %v173 = vpack.c.b16 %v161, %v160
    %v174 = vpack.c.b16 %v163, %v162
    %v175 = vpack.c.b16 %v165, %v164
    %v176 = vpack.c.b16 %v167, %v166
    %v177 = vpack.c.b16 %v169, %v168
    %v202 = vunpack.c.l.b16 %v122
    %v203 = vunpack.c.l.b16 %v123
    %v204 = vunpack.c.l.b16 %v124
    %v205 = vunpack.c.l.b16 %v125
    %v206 = vunpack.c.l.b16 %v126
    %v207 = vunpack.c.l.b16 %v127
    %v208 = vunpack.c.l.b16 %v128
    %v209 = vunpack.c.l.b16 %v129
    %v210 = vunpack.c.l.b16 %v130
    %v211 = vunpack.c.l.b16 %v131
    %v212 = vunpack.c.l.b16 %v132
    %v213 = vunpack.c.l.b16 %v133
    %v214 = vunpack.c.l.b16 %v134
    %v215 = vunpack.c.l.b16 %v135
    %v216 = vunpack.c.l.b16 %v136
    %v217 = vunpack.c.l.b16 %v137
    %v218 = vpack.c.b16 %v203, %v202
    %v219 = vpack.c.b16 %v205, %v204
    %v220 = vpack.c.b16 %v207, %v206
    %v221 = vpack.c.b16 %v209, %v208
    %v222 = vpack.c.b16 %v211, %v210
    %v223 = vpack.c.b16 %v213, %v212
    %v224 = vpack.c.b16 %v215, %v214
    %v225 = vpack.c.b16 %v217, %v216
    %234 = vmatprep.subr.bf16.mxu0 0
    %235 = vmatpush1.bf16.msra.mxu0 %v218
    %236 = vmatprep.subr.bf16.mxu0 0
    %237 = vmatpush1.bf16.msra.mxu0 %v219
    %238 = vmatprep.subr.bf16.mxu0 0
    %239 = vmatpush1.bf16.msra.mxu0 %v220
    %240 = vmatprep.subr.bf16.mxu0 0
    %241 = vmatpush1.bf16.msra.mxu0 %v221
    %242 = vmatprep.subr.bf16.mxu0 0
    %243 = vmatpush1.bf16.msra.mxu0 %v222
    %244 = vmatprep.subr.bf16.mxu0 0
    %245 = vmatpush1.bf16.msra.mxu0 %v223
    %246 = vmatprep.subr.bf16.mxu0 0
    %247 = vmatpush1.bf16.msra.mxu0 %v224
    %248 = vmatprep.subr.bf16.mxu0 0
    %249 = vmatpush1.bf16.msra.mxu0 %v225
    %250 = vmatprep.subr.bf16.mxu0 0
    %251 = vmatpush1.bf16.msra.mxu0 0
    %252 = vmatprep.subr.bf16.mxu0 0
    %253 = vmatpush1.bf16.msra.mxu0 0
    %254 = vmatprep.subr.bf16.mxu0 0
    %255 = vmatpush1.bf16.msra.mxu0 0
    %256 = vmatprep.subr.bf16.mxu0 0
    %257 = vmatpush1.bf16.msra.mxu0 0
    %258 = vmatprep.subr.bf16.mxu0 0
    %259 = vmatpush1.bf16.msra.mxu0 0
    %260 = vmatprep.subr.bf16.mxu0 0
    %261 = vmatpush1.bf16.msra.mxu0 0
    %262 = vmatprep.subr.bf16.mxu0 0
    %263 = vmatpush1.bf16.msra.mxu0 0
    %264 = vmatprep.subr.bf16.mxu0 0
    %265 = vmatpush1.bf16.msra.mxu0 0
    %266 = vmatprep.mubr.bf16.mxu0 0
    %267 = vmatmul.mubr.bf16.gmra.mrb[0].mxu0 %v170
    %v268 = vpop.f32.mrb[0].mxu0
    %v269 = vadd.f32 0.0, %v268
    %v270 = vpop.f32.mrb[0].mxu0
    %v271 = vpop.f32.mrb[0].mxu0
    %v272 = vadd.f32 0.0, %v271
    %v273 = vpop.f32.mrb[0].mxu0
    %274 = vmatprep.mubr.bf16.mxu0 0
    %275 = vmatmul.mubr.bf16.gmra.mrb[0].mxu0 %v171
    %v276 = vpop.f32.mrb[0].mxu0
    %v277 = vadd.f32 0.0, %v276
    %v278 = vpop.f32.mrb[0].mxu0
    %v279 = vpop.f32.mrb[0].mxu0
    %v280 = vadd.f32 0.0, %v279
    %v281 = vpop.f32.mrb[0].mxu0
    %282 = vmatprep.mubr.bf16.mxu0 0
    %283 = vmatmul.mubr.bf16.gmra.mrb[0].mxu0 %v172
    %v284 = vpop.f32.mrb[0].mxu0
    %v285 = vadd.f32 0.0, %v284
    %v286 = vpop.f32.mrb[0].mxu0
    %v287 = vpop.f32.mrb[0].mxu0
    %v288 = vadd.f32 0.0, %v287
    %v289 = vpop.f32.mrb[0].mxu0
    %290 = vmatprep.mubr.bf16.mxu0 0
    %291 = vmatmul.mubr.bf16.gmra.mrb[0].mxu0 %v173
    %v292 = vpop.f32.mrb[0].mxu0
    %v293 = vadd.f32 0.0, %v292
    %v294 = vpop.f32.mrb[0].mxu0
    %v295 = vpop.f32.mrb[0].mxu0
    %v296 = vadd.f32 0.0, %v295
    %v297 = vpop.f32.mrb[0].mxu0
    %298 = vmatprep.mubr.bf16.mxu0 0
    %299 = vmatmul.mubr.bf16.gmra.mrb[0].mxu0 %v174
    %v300 = vpop.f32.mrb[0].mxu0
    %v301 = vadd.f32 0.0, %v300
    %v302 = vpop.f32.mrb[0].mxu0
    %v303 = vpop.f32.mrb[0].mxu0
    %v304 = vadd.f32 0.0, %v303
    %v305 = vpop.f32.mrb[0].mxu0
    %306 = vmatprep.mubr.bf16.mxu0 0
    %307 = vmatmul.mubr.bf16.gmra.mrb[0].mxu0 %v175
    %v308 = vpop.f32.mrb[0].mxu0
    %v309 = vadd.f32 0.0, %v308
    %v310 = vpop.f32.mrb[0].mxu0
    %v311 = vpop.f32.mrb[0].mxu0
    %v312 = vadd.f32 0.0, %v311
    %v313 = vpop.f32.mrb[0].mxu0
    %314 = vmatprep.mubr.bf16.mxu0 0
    %315 = vmatmul.mubr.bf16.gmra.mrb[0].mxu0 %v176
    %v316 = vpop.f32.mrb[0].mxu0
    %v317 = vadd.f32 0.0, %v316
    %v318 = vpop.f32.mrb[0].mxu0
    %v319 = vpop.f32.mrb[0].mxu0
    %v320 = vadd.f32 0.0, %v319
    %v321 = vpop.f32.mrb[0].mxu0
    %322 = vmatprep.mubr.bf16.mxu0 0
    %323 = vmatmul.mubr.bf16.gmra.mrb[0].mxu0 %v177
    %v324 = vpop.f32.mrb[0].mxu0
    %v325 = vadd.f32 0.0, %v324
    %v326 = vpop.f32.mrb[0].mxu0
    %v327 = vpop.f32.mrb[0].mxu0
    %v328 = vadd.f32 0.0, %v327
    %v329 = vpop.f32.mrb[0].mxu0
    %330 = vdwg.mxu0
    %v331 = vpack.c.bf16 %v272, %v269
    %v332 = vpack.c.bf16 %v280, %v277
    %v333 = vpack.c.bf16 %v288, %v285
    %v334 = vpack.c.bf16 %v296, %v293
    %v335 = vpack.c.bf16 %v304, %v301
    %v336 = vpack.c.bf16 %v312, %v309
    %v337 = vpack.c.bf16 %v320, %v317
    %v338 = vpack.c.bf16 %v328, %v325
    %v355 = vunpack.c.l.b16 %v90
    %v356 = vunpack.c.l.b16 %v91
    %v357 = vunpack.c.l.b16 %v92
    %v358 = vunpack.c.l.b16 %v93
    %v359 = vunpack.c.l.b16 %v94
    %v360 = vunpack.c.l.b16 %v95
    %v361 = vunpack.c.l.b16 %v96
    %v362 = vunpack.c.l.b16 %v97
    %v363 = vunpack.c.l.b16 %v98
    %v364 = vunpack.c.l.b16 %v99
    %v365 = vunpack.c.l.b16 %v100
    %v366 = vunpack.c.l.b16 %v101
    %v367 = vunpack.c.l.b16 %v102
    %v368 = vunpack.c.l.b16 %v103
    %v369 = vunpack.c.l.b16 %v104
    %v370 = vunpack.c.l.b16 %v105
    %v371 = vpack.c.b16 %v356, %v355
    %v372 = vpack.c.b16 %v358, %v357
    %v373 = vpack.c.b16 %v360, %v359
    %v374 = vpack.c.b16 %v362, %v361
    %v375 = vpack.c.b16 %v364, %v363
    %v376 = vpack.c.b16 %v366, %v365
    %v377 = vpack.c.b16 %v368, %v367
    %v378 = vpack.c.b16 %v370, %v369
    %387 = vmatprep.subr.bf16.mxu0 0
    %388 = vmatpush1.bf16.msra.mxu0 %v331
    %389 = vmatprep.subr.bf16.mxu0 0
    %390 = vmatpush1.bf16.msra.mxu0 %v332
    %391 = vmatprep.subr.bf16.mxu0 0
    %392 = vmatpush1.bf16.msra.mxu0 %v333
    %393 = vmatprep.subr.bf16.mxu0 0
    %394 = vmatpush1.bf16.msra.mxu0 %v334
    %395 = vmatprep.subr.bf16.mxu0 0
    %396 = vmatpush1.bf16.msra.mxu0 %v335
    %397 = vmatprep.subr.bf16.mxu0 0
    %398 = vmatpush1.bf16.msra.mxu0 %v336
    %399 = vmatprep.subr.bf16.mxu0 0
    %400 = vmatpush1.bf16.msra.mxu0 %v337
    %401 = vmatprep.subr.bf16.mxu0 0
    %402 = vmatpush1.bf16.msra.mxu0 %v338
    %403 = vmatprep.subr.bf16.mxu0 0
    %404 = vmatpush1.bf16.msra.mxu0 0
    %405 = vmatprep.subr.bf16.mxu0 0
    %406 = vmatpush1.bf16.msra.mxu0 0
    %407 = vmatprep.subr.bf16.mxu0 0
    %408 = vmatpush1.bf16.msra.mxu0 0
    %409 = vmatprep.subr.bf16.mxu0 0
    %410 = vmatpush1.bf16.msra.mxu0 0
    %411 = vmatprep.subr.bf16.mxu0 0
    %412 = vmatpush1.bf16.msra.mxu0 0
    %413 = vmatprep.subr.bf16.mxu0 0
    %414 = vmatpush1.bf16.msra.mxu0 0
    %415 = vmatprep.subr.bf16.mxu0 0
    %416 = vmatpush1.bf16.msra.mxu0 0
    %417 = vmatprep.subr.bf16.mxu0 0
    %418 = vmatpush1.bf16.msra.mxu0 0
    %419 = vmatprep.mubr.bf16.mxu0 0
    %420 = vmatmul.mubr.bf16.gmra.mrb[0].mxu0 %v371
    %v421 = vpop.f32.mrb[0].mxu0
    %v422 = vadd.f32 0.0, %v421
    %v423 = vpop.f32.mrb[0].mxu0
    %v424 = vpop.f32.mrb[0].mxu0
    %v425 = vadd.f32 0.0, %v424
    %v426 = vpop.f32.mrb[0].mxu0
    %427 = vmatprep.mubr.bf16.mxu0 0
    %428 = vmatmul.mubr.bf16.gmra.mrb[0].mxu0 %v372
    %v429 = vpop.f32.mrb[0].mxu0
    %v430 = vadd.f32 0.0, %v429
    %v431 = vpop.f32.mrb[0].mxu0
    %v432 = vpop.f32.mrb[0].mxu0
    %v433 = vadd.f32 0.0, %v432
    %v434 = vpop.f32.mrb[0].mxu0
    %435 = vmatprep.mubr.bf16.mxu0 0
    %436 = vmatmul.mubr.bf16.gmra.mrb[0].mxu0 %v373
    %v437 = vpop.f32.mrb[0].mxu0
    %v438 = vadd.f32 0.0, %v437
    %v439 = vpop.f32.mrb[0].mxu0
    %v440 = vpop.f32.mrb[0].mxu0
    %v441 = vadd.f32 0.0, %v440
    %v442 = vpop.f32.mrb[0].mxu0
    %443 = vmatprep.mubr.bf16.mxu0 0
    %444 = vmatmul.mubr.bf16.gmra.mrb[0].mxu0 %v374
    %v445 = vpop.f32.mrb[0].mxu0
    %v446 = vadd.f32 0.0, %v445
    %v447 = vpop.f32.mrb[0].mxu0
    %v448 = vpop.f32.mrb[0].mxu0
    %v449 = vadd.f32 0.0, %v448
    %v450 = vpop.f32.mrb[0].mxu0
    %451 = vmatprep.mubr.bf16.mxu0 0
    %452 = vmatmul.mubr.bf16.gmra.mrb[0].mxu0 %v375
    %v453 = vpop.f32.mrb[0].mxu0
    %v454 = vadd.f32 0.0, %v453
    %v455 = vpop.f32.mrb[0].mxu0
    %v456 = vpop.f32.mrb[0].mxu0
    %v457 = vadd.f32 0.0, %v456
    %v458 = vpop.f32.mrb[0].mxu0
    %459 = vmatprep.mubr.bf16.mxu0 0
    %460 = vmatmul.mubr.bf16.gmra.mrb[0].mxu0 %v376
    %v461 = vpop.f32.mrb[0].mxu0
    %v462 = vadd.f32 0.0, %v461
    %v463 = vpop.f32.mrb[0].mxu0
    %v464 = vpop.f32.mrb[0].mxu0
    %v465 = vadd.f32 0.0, %v464
    %v466 = vpop.f32.mrb[0].mxu0
    %467 = vmatprep.mubr.bf16.mxu0 0
    %468 = vmatmul.mubr.bf16.gmra.mrb[0].mxu0 %v377
    %v469 = vpop.f32.mrb[0].mxu0
    %v470 = vadd.f32 0.0, %v469
    %v471 = vpop.f32.mrb[0].mxu0
    %v472 = vpop.f32.mrb[0].mxu0
    %v473 = vadd.f32 0.0, %v472
    %v474 = vpop.f32.mrb[0].mxu0
    %475 = vmatprep.mubr.bf16.mxu0 0
    %476 = vmatmul.mubr.bf16.gmra.mrb[0].mxu0 %v378
    %v477 = vpop.f32.mrb[0].mxu0
    %v478 = vadd.f32 0.0, %v477
    %v479 = vpop.f32.mrb[0].mxu0
    %v480 = vpop.f32.mrb[0].mxu0
    %v481 = vadd.f32 0.0, %v480
    %v482 = vpop.f32.mrb[0].mxu0
    %483 = vdwg.mxu0
    %v484 = vmax.f32 %v422, 0.0
    %v485 = vmax.f32 %v425, 0.0
    %v486 = vmax.f32 %v430, 0.0
    %v487 = vmax.f32 %v433, 0.0
    %v488 = vmax.f32 %v438, 0.0
    %v489 = vmax.f32 %v441, 0.0
    %v490 = vmax.f32 %v446, 0.0
    %v491 = vmax.f32 %v449, 0.0
    %v492 = vmax.f32 %v454, 0.0
    %v493 = vmax.f32 %v457, 0.0
    %v494 = vmax.f32 %v462, 0.0
    %v495 = vmax.f32 %v465, 0.0
    %v496 = vmax.f32 %v470, 0.0
    %v497 = vmax.f32 %v473, 0.0
    %v498 = vmax.f32 %v478, 0.0
    %v499 = vmax.f32 %v481, 0.0
    %v500 = vpack.c.bf16 %v485, %v484
    %v501 = vpack.c.bf16 %v487, %v486
    %v502 = vpack.c.bf16 %v489, %v488
    %v503 = vpack.c.bf16 %v491, %v490
    %v504 = vpack.c.bf16 %v493, %v492
    %v505 = vpack.c.bf16 %v495, %v494
    %v506 = vpack.c.bf16 %v497, %v496
    %v507 = vpack.c.bf16 %v499, %v498
    %v508 = vld [vmem:[#allocation8] sm:$0xf]
    %v509 = vld [vmem:[#allocation8 + $0x4] sm:$0xf]
    %v510 = vld [vmem:[#allocation8 + $0x8] sm:$0xf]
    %v511 = vld [vmem:[#allocation8 + $0xc] sm:$0xf]
    %v512 = vld [vmem:[#allocation8 + $0x10] sm:$0xf]
    %v513 = vld [vmem:[#allocation8 + $0x14] sm:$0xf]
    %v514 = vld [vmem:[#allocation8 + $0x18] sm:$0xf]
    %v515 = vld [vmem:[#allocation8 + $0x1c] sm:$0xf]
    %v516 = vld [vmem:[#allocation8 + $0x20] sm:$0xf]
    %v517 = vld [vmem:[#allocation8 + $0x24] sm:$0xf]
    %v518 = vld [vmem:[#allocation8 + $0x28] sm:$0xf]
    %v519 = vld [vmem:[#allocation8 + $0x2c] sm:$0xf]
    %v520 = vld [vmem:[#allocation8 + $0x30] sm:$0xf]
    %v521 = vld [vmem:[#allocation8 + $0x34] sm:$0xf]
    %v522 = vld [vmem:[#allocation8 + $0x38] sm:$0xf]
    %v523 = vld [vmem:[#allocation8 + $0x3c] sm:$0xf]
    %v540 = vunpack.c.l.b16 %v508
    %v541 = vunpack.c.l.b16 %v509
    %v542 = vunpack.c.l.b16 %v510
    %v543 = vunpack.c.l.b16 %v511
    %v544 = vunpack.c.l.b16 %v512
    %v545 = vunpack.c.l.b16 %v513
    %v546 = vunpack.c.l.b16 %v514
    %v547 = vunpack.c.l.b16 %v515
    %v548 = vunpack.c.l.b16 %v516
    %v549 = vunpack.c.l.b16 %v517
    %v550 = vunpack.c.l.b16 %v518
    %v551 = vunpack.c.l.b16 %v519
    %v552 = vunpack.c.l.b16 %v520
    %v553 = vunpack.c.l.b16 %v521
    %v554 = vunpack.c.l.b16 %v522
    %v555 = vunpack.c.l.b16 %v523
    %v556 = vpack.c.b16 %v541, %v540
    %v557 = vpack.c.b16 %v543, %v542
    %v558 = vpack.c.b16 %v545, %v544
    %v559 = vpack.c.b16 %v547, %v546
    %v560 = vpack.c.b16 %v549, %v548
    %v561 = vpack.c.b16 %v551, %v550
    %v562 = vpack.c.b16 %v553, %v552
    %v563 = vpack.c.b16 %v555, %v554
    %572 = vmatprep.subr.bf16.mxu0 0
    %573 = vmatpush1.bf16.msra.mxu0 %v556
    %574 = vmatprep.subr.bf16.mxu0 0
    %575 = vmatpush1.bf16.msra.mxu0 %v557
    %576 = vmatprep.subr.bf16.mxu0 0
    %577 = vmatpush1.bf16.msra.mxu0 %v558
    %578 = vmatprep.subr.bf16.mxu0 0
    %579 = vmatpush1.bf16.msra.mxu0 %v559
    %580 = vmatprep.subr.bf16.mxu0 0
    %581 = vmatpush1.bf16.msra.mxu0 %v560
    %582 = vmatprep.subr.bf16.mxu0 0
    %583 = vmatpush1.bf16.msra.mxu0 %v561
    %584 = vmatprep.subr.bf16.mxu0 0
    %585 = vmatpush1.bf16.msra.mxu0 %v562
    %586 = vmatprep.subr.bf16.mxu0 0
    %587 = vmatpush1.bf16.msra.mxu0 %v563
    %588 = vmatprep.subr.bf16.mxu0 0
    %589 = vmatpush1.bf16.msra.mxu0 0
    %590 = vmatprep.subr.bf16.mxu0 0
    %591 = vmatpush1.bf16.msra.mxu0 0
    %592 = vmatprep.subr.bf16.mxu0 0
    %593 = vmatpush1.bf16.msra.mxu0 0
    %594 = vmatprep.subr.bf16.mxu0 0
    %595 = vmatpush1.bf16.msra.mxu0 0
    %596 = vmatprep.subr.bf16.mxu0 0
    %597 = vmatpush1.bf16.msra.mxu0 0
    %598 = vmatprep.subr.bf16.mxu0 0
    %599 = vmatpush1.bf16.msra.mxu0 0
    %600 = vmatprep.subr.bf16.mxu0 0
    %601 = vmatpush1.bf16.msra.mxu0 0
    %602 = vmatprep.subr.bf16.mxu0 0
    %603 = vmatpush1.bf16.msra.mxu0 0
    %604 = vmatprep.mubr.bf16.mxu0 0
    %605 = vmatmul.mubr.bf16.gmra.mrb[0].mxu0 %v500
    %v606 = vpop.f32.mrb[0].mxu0
    %v607 = vadd.f32 0.0, %v606
    %v608 = vpop.f32.mrb[0].mxu0
    %v609 = vpop.f32.mrb[0].mxu0
    %v610 = vadd.f32 0.0, %v609
    %v611 = vpop.f32.mrb[0].mxu0
    %612 = vmatprep.mubr.bf16.mxu0 0
    %613 = vmatmul.mubr.bf16.gmra.mrb[0].mxu0 %v501
    %v614 = vpop.f32.mrb[0].mxu0
    %v615 = vadd.f32 0.0, %v614
    %v616 = vpop.f32.mrb[0].mxu0
    %v617 = vpop.f32.mrb[0].mxu0
    %v618 = vadd.f32 0.0, %v617
    %v619 = vpop.f32.mrb[0].mxu0
    %620 = vmatprep.mubr.bf16.mxu0 0
    %621 = vmatmul.mubr.bf16.gmra.mrb[0].mxu0 %v502
    %v622 = vpop.f32.mrb[0].mxu0
    %v623 = vadd.f32 0.0, %v622
    %v624 = vpop.f32.mrb[0].mxu0
    %v625 = vpop.f32.mrb[0].mxu0
    %v626 = vadd.f32 0.0, %v625
    %v627 = vpop.f32.mrb[0].mxu0
    %628 = vmatprep.mubr.bf16.mxu0 0
    %629 = vmatmul.mubr.bf16.gmra.mrb[0].mxu0 %v503
    %v630 = vpop.f32.mrb[0].mxu0
    %v631 = vadd.f32 0.0, %v630
    %v632 = vpop.f32.mrb[0].mxu0
    %v633 = vpop.f32.mrb[0].mxu0
    %v634 = vadd.f32 0.0, %v633
    %v635 = vpop.f32.mrb[0].mxu0
    %636 = vmatprep.mubr.bf16.mxu0 0
    %637 = vmatmul.mubr.bf16.gmra.mrb[0].mxu0 %v504
    %v638 = vpop.f32.mrb[0].mxu0
    %v639 = vadd.f32 0.0, %v638
    %v640 = vpop.f32.mrb[0].mxu0
    %v641 = vpop.f32.mrb[0].mxu0
    %v642 = vadd.f32 0.0, %v641
    %v643 = vpop.f32.mrb[0].mxu0
    %644 = vmatprep.mubr.bf16.mxu0 0
    %645 = vmatmul.mubr.bf16.gmra.mrb[0].mxu0 %v505
    %v646 = vpop.f32.mrb[0].mxu0
    %v647 = vadd.f32 0.0, %v646
    %v648 = vpop.f32.mrb[0].mxu0
    %v649 = vpop.f32.mrb[0].mxu0
    %v650 = vadd.f32 0.0, %v649
    %v651 = vpop.f32.mrb[0].mxu0
    %652 = vmatprep.mubr.bf16.mxu0 0
    %653 = vmatmul.mubr.bf16.gmra.mrb[0].mxu0 %v506
    %v654 = vpop.f32.mrb[0].mxu0
    %v655 = vadd.f32 0.0, %v654
    %v656 = vpop.f32.mrb[0].mxu0
    %v657 = vpop.f32.mrb[0].mxu0
    %v658 = vadd.f32 0.0, %v657
    %v659 = vpop.f32.mrb[0].mxu0
    %660 = vmatprep.mubr.bf16.mxu0 0
    %661 = vmatmul.mubr.bf16.gmra.mrb[0].mxu0 %v507
    %v662 = vpop.f32.mrb[0].mxu0
    %v663 = vadd.f32 0.0, %v662
    %v664 = vpop.f32.mrb[0].mxu0
    %v665 = vpop.f32.mrb[0].mxu0
    %v666 = vadd.f32 0.0, %v665
    %v667 = vpop.f32.mrb[0].mxu0
    %668 = vdwg.mxu0
    %v669 = vpack.c.bf16 %v610, %v607
    %v670 = vpack.c.bf16 %v618, %v615
    %v671 = vpack.c.bf16 %v626, %v623
    %v672 = vpack.c.bf16 %v634, %v631
    %v673 = vpack.c.bf16 %v642, %v639
    %v674 = vpack.c.bf16 %v650, %v647
    %v675 = vpack.c.bf16 %v658, %v655
    %v676 = vpack.c.bf16 %v666, %v663
    %677 = vmatprep.subr.bf16.mxu0 0
    %678 = vmatpush1.bf16.msra.mxu0 %v669
    %679 = vmatprep.subr.bf16.mxu0 0
    %680 = vmatpush1.bf16.msra.mxu0 %v670
    %681 = vmatprep.subr.bf16.mxu0 0
    %682 = vmatpush1.bf16.msra.mxu0 %v671
    %683 = vmatprep.subr.bf16.mxu0 0
    %684 = vmatpush1.bf16.msra.mxu0 %v672
    %685 = vmatprep.subr.bf16.mxu0 0
    %686 = vmatpush1.bf16.msra.mxu0 %v673
    %687 = vmatprep.subr.bf16.mxu0 0
    %688 = vmatpush1.bf16.msra.mxu0 %v674
    %689 = vmatprep.subr.bf16.mxu0 0
    %690 = vmatpush1.bf16.msra.mxu0 %v675
    %691 = vmatprep.subr.bf16.mxu0 0
    %692 = vmatpush1.bf16.msra.mxu0 %v676
    %693 = vmatprep.subr.bf16.mxu0 0
    %694 = vmatpush1.bf16.msra.mxu0 0
    %695 = vmatprep.subr.bf16.mxu0 0
    %696 = vmatpush1.bf16.msra.mxu0 0
    %697 = vmatprep.subr.bf16.mxu0 0
    %698 = vmatpush1.bf16.msra.mxu0 0
    %699 = vmatprep.subr.bf16.mxu0 0
    %700 = vmatpush1.bf16.msra.mxu0 0
    %701 = vmatprep.subr.bf16.mxu0 0
    %702 = vmatpush1.bf16.msra.mxu0 0
    %703 = vmatprep.subr.bf16.mxu0 0
    %704 = vmatpush1.bf16.msra.mxu0 0
    %705 = vmatprep.subr.bf16.mxu0 0
    %706 = vmatpush1.bf16.msra.mxu0 0
    %707 = vmatprep.subr.bf16.mxu0 0
    %708 = vmatpush1.bf16.msra.mxu0 0
    %709 = vmatprep.mubr.bf16.mxu0 0
    %710 = vmatmul.mubr.bf16.gmra.mrb[0].mxu0 %v371
    %v711 = vpop.f32.mrb[0].mxu0
    %v712 = vadd.f32 0.0, %v711
    %v713 = vpop.f32.mrb[0].mxu0
    %v714 = vpop.f32.mrb[0].mxu0
    %v715 = vadd.f32 0.0, %v714
    %v716 = vpop.f32.mrb[0].mxu0
    %717 = vmatprep.mubr.bf16.mxu0 0
    %718 = vmatmul.mubr.bf16.gmra.mrb[0].mxu0 %v372
    %v719 = vpop.f32.mrb[0].mxu0
    %v720 = vadd.f32 0.0, %v719
    %v721 = vpop.f32.mrb[0].mxu0
    %v722 = vpop.f32.mrb[0].mxu0
    %v723 = vadd.f32 0.0, %v722
    %v724 = vpop.f32.mrb[0].mxu0
    %725 = vmatprep.mubr.bf16.mxu0 0
    %726 = vmatmul.mubr.bf16.gmra.mrb[0].mxu0 %v373
    %v727 = vpop.f32.mrb[0].mxu0
    %v728 = vadd.f32 0.0, %v727
    %v729 = vpop.f32.mrb[0].mxu0
    %v730 = vpop.f32.mrb[0].mxu0
    %v731 = vadd.f32 0.0, %v730
    %v732 = vpop.f32.mrb[0].mxu0
    %733 = vmatprep.mubr.bf16.mxu0 0
    %734 = vmatmul.mubr.bf16.gmra.mrb[0].mxu0 %v374
    %v735 = vpop.f32.mrb[0].mxu0
    %v736 = vadd.f32 0.0, %v735
    %v737 = vpop.f32.mrb[0].mxu0
    %v738 = vpop.f32.mrb[0].mxu0
    %v739 = vadd.f32 0.0, %v738
    %v740 = vpop.f32.mrb[0].mxu0
    %741 = vmatprep.mubr.bf16.mxu0 0
    %742 = vmatmul.mubr.bf16.gmra.mrb[0].mxu0 %v375
    %v743 = vpop.f32.mrb[0].mxu0
    %v744 = vadd.f32 0.0, %v743
    %v745 = vpop.f32.mrb[0].mxu0
    %v746 = vpop.f32.mrb[0].mxu0
    %v747 = vadd.f32 0.0, %v746
    %v748 = vpop.f32.mrb[0].mxu0
    %749 = vmatprep.mubr.bf16.mxu0 0
    %750 = vmatmul.mubr.bf16.gmra.mrb[0].mxu0 %v376
    %v751 = vpop.f32.mrb[0].mxu0
    %v752 = vadd.f32 0.0, %v751
    %v753 = vpop.f32.mrb[0].mxu0
    %v754 = vpop.f32.mrb[0].mxu0
    %v755 = vadd.f32 0.0, %v754
    %v756 = vpop.f32.mrb[0].mxu0
    %757 = vmatprep.mubr.bf16.mxu0 0
    %758 = vmatmul.mubr.bf16.gmra.mrb[0].mxu0 %v377
    %v759 = vpop.f32.mrb[0].mxu0
    %v760 = vadd.f32 0.0, %v759
    %v761 = vpop.f32.mrb[0].mxu0
    %v762 = vpop.f32.mrb[0].mxu0
    %v763 = vadd.f32 0.0, %v762
    %v764 = vpop.f32.mrb[0].mxu0
    %765 = vmatprep.mubr.bf16.mxu0 0
    %766 = vmatmul.mubr.bf16.gmra.mrb[0].mxu0 %v378
    %v767 = vpop.f32.mrb[0].mxu0
    %v768 = vadd.f32 0.0, %v767
    %v769 = vpop.f32.mrb[0].mxu0
    %v770 = vpop.f32.mrb[0].mxu0
    %v771 = vadd.f32 0.0, %v770
    %v772 = vpop.f32.mrb[0].mxu0
    %773 = vdwg.mxu0
    %v774 = vmax.f32 %v712, 0.0
    %v775 = vmax.f32 %v715, 0.0
    %v776 = vmax.f32 %v720, 0.0
    %v777 = vmax.f32 %v723, 0.0
    %v778 = vmax.f32 %v728, 0.0
    %v779 = vmax.f32 %v731, 0.0
    %v780 = vmax.f32 %v736, 0.0
    %v781 = vmax.f32 %v739, 0.0
    %v782 = vmax.f32 %v744, 0.0
    %v783 = vmax.f32 %v747, 0.0
    %v784 = vmax.f32 %v752, 0.0
    %v785 = vmax.f32 %v755, 0.0
    %v786 = vmax.f32 %v760, 0.0
    %v787 = vmax.f32 %v763, 0.0
    %v788 = vmax.f32 %v768, 0.0
    %v789 = vmax.f32 %v771, 0.0
    %v790 = vpack.c.bf16 %v775, %v774
    %v791 = vpack.c.bf16 %v777, %v776
    %v792 = vpack.c.bf16 %v779, %v778
    %v793 = vpack.c.bf16 %v781, %v780
    %v794 = vpack.c.bf16 %v783, %v782
    %v795 = vpack.c.bf16 %v785, %v784
    %v796 = vpack.c.bf16 %v787, %v786
    %v797 = vpack.c.bf16 %v789, %v788
    %v798 = vld [vmem:[#allocation10] sm:$0xf]
    %v799 = vld [vmem:[#allocation10 + $0x4] sm:$0xf]
    %v800 = vld [vmem:[#allocation10 + $0x8] sm:$0xf]
    %v801 = vld [vmem:[#allocation10 + $0xc] sm:$0xf]
    %v802 = vld [vmem:[#allocation10 + $0x10] sm:$0xf]
    %v803 = vld [vmem:[#allocation10 + $0x14] sm:$0xf]
    %v804 = vld [vmem:[#allocation10 + $0x18] sm:$0xf]
    %v805 = vld [vmem:[#allocation10 + $0x1c] sm:$0xf]
    %v806 = vld [vmem:[#allocation10 + $0x20] sm:$0xf]
    %v807 = vld [vmem:[#allocation10 + $0x24] sm:$0xf]
    %v808 = vld [vmem:[#allocation10 + $0x28] sm:$0xf]
    %v809 = vld [vmem:[#allocation10 + $0x2c] sm:$0xf]
    %v810 = vld [vmem:[#allocation10 + $0x30] sm:$0xf]
    %v811 = vld [vmem:[#allocation10 + $0x34] sm:$0xf]
    %v812 = vld [vmem:[#allocation10 + $0x38] sm:$0xf]
    %v813 = vld [vmem:[#allocation10 + $0x3c] sm:$0xf]
    %v830 = vunpack.c.l.b16 %v798
    %v831 = vunpack.c.l.b16 %v799
    %v832 = vunpack.c.l.b16 %v800
    %v833 = vunpack.c.l.b16 %v801
    %v834 = vunpack.c.l.b16 %v802
    %v835 = vunpack.c.l.b16 %v803
    %v836 = vunpack.c.l.b16 %v804
    %v837 = vunpack.c.l.b16 %v805
    %v838 = vunpack.c.l.b16 %v806
    %v839 = vunpack.c.l.b16 %v807
    %v840 = vunpack.c.l.b16 %v808
    %v841 = vunpack.c.l.b16 %v809
    %v842 = vunpack.c.l.b16 %v810
    %v843 = vunpack.c.l.b16 %v811
    %v844 = vunpack.c.l.b16 %v812
    %v845 = vunpack.c.l.b16 %v813
    %v846 = vpack.c.b16 %v831, %v830
    %v847 = vpack.c.b16 %v833, %v832
    %v848 = vpack.c.b16 %v835, %v834
    %v849 = vpack.c.b16 %v837, %v836
    %v850 = vpack.c.b16 %v839, %v838
    %v851 = vpack.c.b16 %v841, %v840
    %v852 = vpack.c.b16 %v843, %v842
    %v853 = vpack.c.b16 %v845, %v844
    %862 = vmatprep.subr.bf16.mxu0 0
    %863 = vmatpush1.bf16.msra.mxu0 %v846
    %864 = vmatprep.subr.bf16.mxu0 0
    %865 = vmatpush1.bf16.msra.mxu0 %v847
    %866 = vmatprep.subr.bf16.mxu0 0
    %867 = vmatpush1.bf16.msra.mxu0 %v848
    %868 = vmatprep.subr.bf16.mxu0 0
    %869 = vmatpush1.bf16.msra.mxu0 %v849
    %870 = vmatprep.subr.bf16.mxu0 0
    %871 = vmatpush1.bf16.msra.mxu0 %v850
    %872 = vmatprep.subr.bf16.mxu0 0
    %873 = vmatpush1.bf16.msra.mxu0 %v851
    %874 = vmatprep.subr.bf16.mxu0 0
    %875 = vmatpush1.bf16.msra.mxu0 %v852
    %876 = vmatprep.subr.bf16.mxu0 0
    %877 = vmatpush1.bf16.msra.mxu0 %v853
    %878 = vmatprep.subr.bf16.mxu0 0
    %879 = vmatpush1.bf16.msra.mxu0 0
    %880 = vmatprep.subr.bf16.mxu0 0
    %881 = vmatpush1.bf16.msra.mxu0 0
    %882 = vmatprep.subr.bf16.mxu0 0
    %883 = vmatpush1.bf16.msra.mxu0 0
    %884 = vmatprep.subr.bf16.mxu0 0
    %885 = vmatpush1.bf16.msra.mxu0 0
    %886 = vmatprep.subr.bf16.mxu0 0
    %887 = vmatpush1.bf16.msra.mxu0 0
    %888 = vmatprep.subr.bf16.mxu0 0
    %889 = vmatpush1.bf16.msra.mxu0 0
    %890 = vmatprep.subr.bf16.mxu0 0
    %891 = vmatpush1.bf16.msra.mxu0 0
    %892 = vmatprep.subr.bf16.mxu0 0
    %893 = vmatpush1.bf16.msra.mxu0 0
    %894 = vmatprep.mubr.bf16.mxu0 0
    %895 = vmatmul.mubr.bf16.gmra.mrb[0].mxu0 %v790
    %v896 = vpop.f32.mrb[0].mxu0
    %v897 = vadd.f32 0.0, %v896
    %v898 = vpop.f32.mrb[0].mxu0
    %v899 = vpop.f32.mrb[0].mxu0
    %v900 = vadd.f32 0.0, %v899
    %v901 = vpop.f32.mrb[0].mxu0
    %902 = vmatprep.mubr.bf16.mxu0 0
    %903 = vmatmul.mubr.bf16.gmra.mrb[0].mxu0 %v791
    %v904 = vpop.f32.mrb[0].mxu0
    %v905 = vadd.f32 0.0, %v904
    %v906 = vpop.f32.mrb[0].mxu0
    %v907 = vpop.f32.mrb[0].mxu0
    %v908 = vadd.f32 0.0, %v907
    %v909 = vpop.f32.mrb[0].mxu0
    %910 = vmatprep.mubr.bf16.mxu0 0
    %911 = vmatmul.mubr.bf16.gmra.mrb[0].mxu0 %v792
    %v912 = vpop.f32.mrb[0].mxu0
    %v913 = vadd.f32 0.0, %v912
    %v914 = vpop.f32.mrb[0].mxu0
    %v915 = vpop.f32.mrb[0].mxu0
    %v916 = vadd.f32 0.0, %v915
    %v917 = vpop.f32.mrb[0].mxu0
    %918 = vmatprep.mubr.bf16.mxu0 0
    %919 = vmatmul.mubr.bf16.gmra.mrb[0].mxu0 %v793
    %v920 = vpop.f32.mrb[0].mxu0
    %v921 = vadd.f32 0.0, %v920
    %v922 = vpop.f32.mrb[0].mxu0
    %v923 = vpop.f32.mrb[0].mxu0
    %v924 = vadd.f32 0.0, %v923
    %v925 = vpop.f32.mrb[0].mxu0
    %926 = vmatprep.mubr.bf16.mxu0 0
    %927 = vmatmul.mubr.bf16.gmra.mrb[0].mxu0 %v794
    %v928 = vpop.f32.mrb[0].mxu0
    %v929 = vadd.f32 0.0, %v928
    %v930 = vpop.f32.mrb[0].mxu0
    %v931 = vpop.f32.mrb[0].mxu0
    %v932 = vadd.f32 0.0, %v931
    %v933 = vpop.f32.mrb[0].mxu0
    %934 = vmatprep.mubr.bf16.mxu0 0
    %935 = vmatmul.mubr.bf16.gmra.mrb[0].mxu0 %v795
    %v936 = vpop.f32.mrb[0].mxu0
    %v937 = vadd.f32 0.0, %v936
    %v938 = vpop.f32.mrb[0].mxu0
    %v939 = vpop.f32.mrb[0].mxu0
    %v940 = vadd.f32 0.0, %v939
    %v941 = vpop.f32.mrb[0].mxu0
    %942 = vmatprep.mubr.bf16.mxu0 0
    %943 = vmatmul.mubr.bf16.gmra.mrb[0].mxu0 %v796
    %v944 = vpop.f32.mrb[0].mxu0
    %v945 = vadd.f32 0.0, %v944
    %v946 = vpop.f32.mrb[0].mxu0
    %v947 = vpop.f32.mrb[0].mxu0
    %v948 = vadd.f32 0.0, %v947
    %v949 = vpop.f32.mrb[0].mxu0
    %950 = vmatprep.mubr.bf16.mxu0 0
    %951 = vmatmul.mubr.bf16.gmra.mrb[0].mxu0 %v797
    %v952 = vpop.f32.mrb[0].mxu0
    %v953 = vadd.f32 0.0, %v952
    %v954 = vpop.f32.mrb[0].mxu0
    %v955 = vpop.f32.mrb[0].mxu0
    %v956 = vadd.f32 0.0, %v955
    %v957 = vpop.f32.mrb[0].mxu0
    %958 = vdwg.mxu0
    %v959 = vpack.c.bf16 %v900, %v897
    %v960 = vpack.c.bf16 %v908, %v905
    %v961 = vpack.c.bf16 %v916, %v913
    %v962 = vpack.c.bf16 %v924, %v921
    %v963 = vpack.c.bf16 %v932, %v929
    %v964 = vpack.c.bf16 %v940, %v937
    %v965 = vpack.c.bf16 %v948, %v945
    %v966 = vpack.c.bf16 %v956, %v953
    %967 = vmatprep.subr.bf16.mxu0 0
    %968 = vmatpush1.bf16.msra.mxu0 %v959
    %969 = vmatprep.subr.bf16.mxu0 0
    %970 = vmatpush1.bf16.msra.mxu0 %v960
    %971 = vmatprep.subr.bf16.mxu0 0
    %972 = vmatpush1.bf16.msra.mxu0 %v961
    %973 = vmatprep.subr.bf16.mxu0 0
    %974 = vmatpush1.bf16.msra.mxu0 %v962
    %975 = vmatprep.subr.bf16.mxu0 0
    %976 = vmatpush1.bf16.msra.mxu0 %v963
    %977 = vmatprep.subr.bf16.mxu0 0
    %978 = vmatpush1.bf16.msra.mxu0 %v964
    %979 = vmatprep.subr.bf16.mxu0 0
    %980 = vmatpush1.bf16.msra.mxu0 %v965
    %981 = vmatprep.subr.bf16.mxu0 0
    %982 = vmatpush1.bf16.msra.mxu0 %v966
    %983 = vmatprep.subr.bf16.mxu0 0
    %984 = vmatpush1.bf16.msra.mxu0 0
    %985 = vmatprep.subr.bf16.mxu0 0
    %986 = vmatpush1.bf16.msra.mxu0 0
    %987 = vmatprep.subr.bf16.mxu0 0
    %988 = vmatpush1.bf16.msra.mxu0 0
    %989 = vmatprep.subr.bf16.mxu0 0
    %990 = vmatpush1.bf16.msra.mxu0 0
    %991 = vmatprep.subr.bf16.mxu0 0
    %992 = vmatpush1.bf16.msra.mxu0 0
    %993 = vmatprep.subr.bf16.mxu0 0
    %994 = vmatpush1.bf16.msra.mxu0 0
    %995 = vmatprep.subr.bf16.mxu0 0
    %996 = vmatpush1.bf16.msra.mxu0 0
    %997 = vmatprep.subr.bf16.mxu0 0
    %998 = vmatpush1.bf16.msra.mxu0 0
    %999 = vmatprep.mubr.bf16.mxu0 0
    %1000 = vmatmul.mubr.bf16.gmra.mrb[0].mxu0 %v371
    %v1001 = vpop.f32.mrb[0].mxu0
    %v1002 = vadd.f32 0.0, %v1001
    %v1003 = vpop.f32.mrb[0].mxu0
    %v1004 = vpop.f32.mrb[0].mxu0
    %v1005 = vadd.f32 0.0, %v1004
    %v1006 = vpop.f32.mrb[0].mxu0
    %1007 = vmatprep.mubr.bf16.mxu0 0
    %1008 = vmatmul.mubr.bf16.gmra.mrb[0].mxu0 %v372
    %v1009 = vpop.f32.mrb[0].mxu0
    %v1010 = vadd.f32 0.0, %v1009
    %v1011 = vpop.f32.mrb[0].mxu0
    %v1012 = vpop.f32.mrb[0].mxu0
    %v1013 = vadd.f32 0.0, %v1012
    %v1014 = vpop.f32.mrb[0].mxu0
    %1015 = vmatprep.mubr.bf16.mxu0 0
    %1016 = vmatmul.mubr.bf16.gmra.mrb[0].mxu0 %v373
    %v1017 = vpop.f32.mrb[0].mxu0
    %v1018 = vadd.f32 0.0, %v1017
    %v1019 = vpop.f32.mrb[0].mxu0
    %v1020 = vpop.f32.mrb[0].mxu0
    %v1021 = vadd.f32 0.0, %v1020
    %v1022 = vpop.f32.mrb[0].mxu0
    %1023 = vmatprep.mubr.bf16.mxu0 0
    %1024 = vmatmul.mubr.bf16.gmra.mrb[0].mxu0 %v374
    %v1025 = vpop.f32.mrb[0].mxu0
    %v1026 = vadd.f32 0.0, %v1025
    %v1027 = vpop.f32.mrb[0].mxu0
    %v1028 = vpop.f32.mrb[0].mxu0
    %v1029 = vadd.f32 0.0, %v1028
    %v1030 = vpop.f32.mrb[0].mxu0
    %1031 = vmatprep.mubr.bf16.mxu0 0
    %1032 = vmatmul.mubr.bf16.gmra.mrb[0].mxu0 %v375
    %v1033 = vpop.f32.mrb[0].mxu0
    %v1034 = vadd.f32 0.0, %v1033
    %v1035 = vpop.f32.mrb[0].mxu0
    %v1036 = vpop.f32.mrb[0].mxu0
    %v1037 = vadd.f32 0.0, %v1036
    %v1038 = vpop.f32.mrb[0].mxu0
    %1039 = vmatprep.mubr.bf16.mxu0 0
    %1040 = vmatmul.mubr.bf16.gmra.mrb[0].mxu0 %v376
    %v1041 = vpop.f32.mrb[0].mxu0
    %v1042 = vadd.f32 0.0, %v1041
    %v1043 = vpop.f32.mrb[0].mxu0
    %v1044 = vpop.f32.mrb[0].mxu0
    %v1045 = vadd.f32 0.0, %v1044
    %v1046 = vpop.f32.mrb[0].mxu0
    %1047 = vmatprep.mubr.bf16.mxu0 0
    %1048 = vmatmul.mubr.bf16.gmra.mrb[0].mxu0 %v377
    %v1049 = vpop.f32.mrb[0].mxu0
    %v1050 = vadd.f32 0.0, %v1049
    %v1051 = vpop.f32.mrb[0].mxu0
    %v1052 = vpop.f32.mrb[0].mxu0
    %v1053 = vadd.f32 0.0, %v1052
    %v1054 = vpop.f32.mrb[0].mxu0
    %1055 = vmatprep.mubr.bf16.mxu0 0
    %1056 = vmatmul.mubr.bf16.gmra.mrb[0].mxu0 %v378
    %v1057 = vpop.f32.mrb[0].mxu0
    %v1058 = vadd.f32 0.0, %v1057
    %v1059 = vpop.f32.mrb[0].mxu0
    %v1060 = vpop.f32.mrb[0].mxu0
    %v1061 = vadd.f32 0.0, %v1060
    %v1062 = vpop.f32.mrb[0].mxu0
    %1063 = vdwg.mxu0
    %1064 = vst [vmem:[#allocation11] sm:$0xff] %v1002
    %1065 = vst [vmem:[#allocation11 + $0x8] sm:$0xff] %v1005
    %1066 = vst [vmem:[#allocation11 + $0x10] sm:$0xff] %v1010
    %1067 = vst [vmem:[#allocation11 + $0x18] sm:$0xff] %v1013
    %1068 = vst [vmem:[#allocation11 + $0x20] sm:$0xff] %v1018
    %1069 = vst [vmem:[#allocation11 + $0x28] sm:$0xff] %v1021
    %1070 = vst [vmem:[#allocation11 + $0x30] sm:$0xff] %v1026
    %1071 = vst [vmem:[#allocation11 + $0x38] sm:$0xff] %v1029
    %1072 = vst [vmem:[#allocation11 + $0x40] sm:$0xff] %v1034
    %1073 = vst [vmem:[#allocation11 + $0x48] sm:$0xff] %v1037
    %1074 = vst [vmem:[#allocation11 + $0x50] sm:$0xff] %v1042
    %1075 = vst [vmem:[#allocation11 + $0x58] sm:$0xff] %v1045
    %1076 = vst [vmem:[#allocation11 + $0x60] sm:$0xff] %v1050
    %1077 = vst [vmem:[#allocation11 + $0x68] sm:$0xff] %v1053
    %1078 = vst [vmem:[#allocation11 + $0x70] sm:$0xff] %v1058
    %1079 = vst [vmem:[#allocation11 + $0x78] sm:$0xff] %v1061
    // Predicated region
    $region42: #{tpu_custom_call.1} parent=1 // pred_check
      _
    $region43: #{tpu_custom_call.1} parent=1 // pred_check_branch
      %1081 = sbr.rel (0) target = $region45
    $region44: #{tpu_custom_call.1} parent=1 // pred_region
      %s1083 = ssub.s32 2048, 2048
      %1084 = vsyncadd [#allocation4], %s1083
      %s1085 = sshll.u32 [#allocation11], 4
      %s1086 = int_to_ptr.vmem [resolvable:$true] %s1085
      %1091 = dma.vmem_to_hbm [thread:$0]  %s1086, 2048, %s5, [#allocation4], 128, 128, 8
    $region45: #{tpu_custom_call.1} parent=1 // pred_fallthru
      _
    // Predicated region
    $region46: #{tpu_custom_call.1} parent=1 // pred_check
      _
    $region47: #{tpu_custom_call.1} parent=1 // pred_check_branch
      %1093 = sbr.rel (0) target = $region49
    $region48: #{tpu_custom_call.1} parent=1 // pred_region
      %1094 = dma.done [#allocation4], 2048
    $region49: #{tpu_custom_call.1} parent=1 // pred_fallthru
      _
    %1095 = vsyncpa [#allocation3], 1
    %1096 = vsyncpa [#allocation6], 1
    %1097 = vsyncpa [#allocation9], 1
    %1098 = vsyncpa [#allocation4], 1

</llo_original>
